<compile_context>
chip_gen: v7x
topology: tpu7x:2x2x1
jax: 0.10.0
libtpu: 0.0.40
codegen_flags: <defaults>
</compile_context>

<pallas_src>
import jax
import jax.numpy as jnp
from jax.experimental import pallas as pl
from jax.experimental.pallas import tpu as pltpu

BASE = 0.0
SLOPE = 0.1

# Target ~2 MiB per block: big enough to amortize ~0.35us/step grid overhead
# (>=85% of HBM roofline measured for mem-bound elementwise), small enough that
# the 4x double-buffered footprint (8 MiB) fits every chip's default scoped
# VMEM limit (16 MiB v5e, 32 MiB v6e/v7x) with no compiler-param overrides.
_TARGET_BLOCK_BYTES = 2 * 1024 * 1024


def _abs_act_kernel(x_ref, o_ref):
    # Elementwise hot path on the VPU: |x| * slope (+ base only if nonzero).
    y = jnp.abs(x_ref[...]) * SLOPE
    if BASE != 0.0:  # trace-time constant; add-zero elided when base == 0
        y = y + BASE
    o_ref[...] = y.astype(o_ref.dtype)


def _choose_lanes(n: int):
    """Pick the widest lane-dense last dim that avoids padding if possible."""
    for lanes in (1024, 512, 256, 128):
        if n % lanes == 0:
            return lanes, 0
    lanes = 128
    return lanes, (-n) % lanes  # pad only up to the 128-lane multiple


def abs_activation(x: jax.Array) -> jax.Array:
    """Apply ret = base + |x| * slope elementwise via a Pallas TPU kernel."""
    orig_shape = x.shape
    orig_dtype = x.dtype
    n = x.size
    if n == 0:
        # Nothing to do; keep semantics without launching a kernel.
        return (jnp.abs(x) * SLOPE + BASE).astype(orig_dtype)

    lanes, pad = _choose_lanes(n)
    x_flat = x.reshape(-1)
    if pad:
        # Only for irregular sizes; at most (lanes - 1) extra elements.
        x_flat = jnp.pad(x_flat, (0, pad))
    rows = (n + pad) // lanes
    x2d = x_flat.reshape(rows, lanes)

    itemsize = jnp.dtype(orig_dtype).itemsize
    # ~2 MiB of rows per block; multiple of 32 satisfies the sublane tiling for
    # f32 (8), bf16 (16) and int8 (32).
    tile_rows = max(32, (_TARGET_BLOCK_BYTES // (lanes * itemsize)) // 32 * 32)

    if rows <= tile_rows:
        block_rows = rows            # single block == full array (always legal)
        grid = (1,)
    else:
        block_rows = tile_rows       # ragged last block handled by Pallas masking
        grid = (pl.cdiv(rows, tile_rows),)

    out2d = pl.pallas_call(
        _abs_act_kernel,
        out_shape=jax.ShapeDtypeStruct((rows, lanes), orig_dtype),
        grid_spec=pltpu.PrefetchScalarGridSpec(
            num_scalar_prefetch=0,
            grid=grid,
            in_specs=[pl.BlockSpec((block_rows, lanes), lambda i: (i, 0))],
            out_specs=pl.BlockSpec((block_rows, lanes), lambda i: (i, 0)),
        ),
        compiler_params=pltpu.CompilerParams(
            # Independent blocks -> shard across both TensorCores on v7x.
            dimension_semantics=("parallel",)
        ),
    )(x2d)

    if pad:
        out = out2d.reshape(-1)[:n].reshape(orig_shape)
    else:
        out = out2d.reshape(orig_shape)  # pure metadata reshape, no extra pass
    return out


if __name__ == "__main__":
    key = jax.random.PRNGKey(0)
    # NCHW input consistent with a typical conv-style module.
    x = jax.random.normal(key, (2, 4, 16, 16), dtype=jnp.float32)

    y = abs_activation(x)
    jax.block_until_ready(y)

    # Reference check (plain JAX).
    y_ref = BASE + jnp.abs(x) * SLOPE
    assert y.shape == x.shape and y.dtype == x.dtype
    assert jnp.allclose(y, y_ref, atol=1e-6, rtol=1e-6)

    print("KERNEL_OK")
</pallas_src>

<mosaic_0001>
module attributes {stable_mosaic.version = 11 : i64} {
  func.func @_abs_act_kernel(%arg0: i32, %arg1: memref<2x1024xf32, #tpu.memory_space<vmem>>, %arg2: memref<2x1024xf32, #tpu.memory_space<vmem>>) attributes {dimension_semantics = [#tpu.dimension_semantics<parallel>], iteration_bounds = array<i64: 1>, scalar_prefetch = 0 : i64, scratch_operands = 0 : i64, tpu.core_type = #tpu.core_type<tc>, window_params = [{transform_indices = @transform_0, window_bounds = array<i64: 2, 1024>}, {transform_indices = @transform_1, window_bounds = array<i64: 2, 1024>}]} {
    %c0 = arith.constant 0 : index
    %c0_0 = arith.constant 0 : index
    %0 = vector.load %arg1[%c0, %c0_0] : memref<2x1024xf32, #tpu.memory_space<vmem>>, vector<2x1024xf32>
    %1 = math.absf %0 : vector<2x1024xf32>
    %cst = arith.constant 1.000000e-01 : f32
    %2 = vector.broadcast %cst : f32 to vector<2x1024xf32>
    %3 = arith.mulf %1, %2 : vector<2x1024xf32>
    %c0_1 = arith.constant 0 : index
    %c0_2 = arith.constant 0 : index
    %4 = vector.load %arg2[%c0_1, %c0_2] : memref<2x1024xf32, #tpu.memory_space<vmem>>, vector<2x1024xf32>
    tpu.vector_store %arg2[%c0_1, %c0_2], %3 {strides = array<i32>} : memref<2x1024xf32, #tpu.memory_space<vmem>>, vector<2x1024xf32>,
    return
  }
  func.func @transform_0(%arg0: i32) -> (i32, i32) {
    %c0_i32 = arith.constant 0 : i32
    %c0_i32_0 = arith.constant 0 : i32
    return %arg0, %c0_i32 : i32, i32
  }
  func.func @transform_1(%arg0: i32) -> (i32, i32) {
    %c0_i32 = arith.constant 0 : i32
    %c0_i32_0 = arith.constant 0 : i32
    return %arg0, %c0_i32 : i32, i32
  }
}

</mosaic_0001>

<llo_original>
// kernel: tpu_custom_call.1
$region0: #{tpu_custom_call.1}
  #allocation0 [shape = 'u32[]', space=smem, size = 0x4, offset = 0x4, fixed_abs, tag = 'smem constant byte address 0x4 - core index']
  #allocation1 [shape = 'u32[144,128]{1,0:T(1,128)}', space=vmem, size = 0x12000, scoped, tag = 'internal scratch']
  %s0 = inlined_call_operand.hbm [shape: f32[2,1024], index: 0, kind: input, shape index: {}]
  %s1 = inlined_call_operand.hbm [shape: f32[2,1024], index: 1, kind: output, shape index: {}]
  %s2 = sld [smem:[#allocation0]]
  $region18: #{tpu_custom_call.1} parent=0
    _
  %s4 = ssub.s32 1, %s2
  %s5 = scalar_select 0, %s4, %s2
  $region1: #{tpu_custom_call.1} parent=0
    #allocation2 [shape = 'u8[8192]{0}', space=vmem, size = 0x2000, scoped, tag = 'input window, operand 0, single buffered']
    #allocation3 [shape = 's32[1]{0}', space=sflag, size = 0x4, scoped, tag = 'scoped memory for tpu_custom_call.1']
    #allocation4 [shape = 's32[1]{0}', space=sflag, size = 0x4, scoped, tag = 'scoped memory for tpu_custom_call.1']
    #allocation5 [shape = 'u8[8192]{0}', space=vmem, size = 0x2000, scoped, tag = 'output window, operand 0, single buffered']
    %6 = vsyncpa [#allocation3], 0
    %7 = vsyncpa [#allocation4], 0
    // Predicated region
    $region2: #{tpu_custom_call.1} parent=1 // pred_check
      _
    $region3: #{tpu_custom_call.1} parent=1 // pred_check_branch
      %9 = sbr.rel (0) target = $region5
    $region4: #{tpu_custom_call.1} parent=1 // pred_region
      %s11 = ssub.s32 256, 256
      %12 = vsyncadd [#allocation3], %s11
      %s14 = sshll.u32 [#allocation2], 4
      %s15 = int_to_ptr.vmem [resolvable:$true] %s14
      %17 = dma.hbm_to_vmem [thread:$0]  %s0, 256, %s15, [#allocation3]
    $region5: #{tpu_custom_call.1} parent=1 // pred_fallthru
      _
    // Predicated region
    $region6: #{tpu_custom_call.1} parent=1 // pred_check
      _
    $region7: #{tpu_custom_call.1} parent=1 // pred_check_branch
      %19 = sbr.rel (0) target = $region9
    $region8: #{tpu_custom_call.1} parent=1 // pred_region
      %20 = dma.done [#allocation3], 256
    $region9: #{tpu_custom_call.1} parent=1 // pred_fallthru
      _
    %v21 = vld [vmem:[#allocation2] sm:$0xff]
    %v22 = vld [vmem:[#allocation2 + $0x8] sm:$0xff]
    %v23 = vand.u32 2147483647, %v21
    %v24 = vand.u32 2147483647, %v22
    %v25 = vmul.f32 %v23, 0.1
    %v26 = vmul.f32 %v24, 0.1
    %27 = vst [vmem:[#allocation5] sm:$0xff] %v25
    %28 = vst [vmem:[#allocation5 + $0x8] sm:$0xff] %v26
    // Predicated region
    $region10: #{tpu_custom_call.1} parent=1 // pred_check
      _
    $region11: #{tpu_custom_call.1} parent=1 // pred_check_branch
      %30 = sbr.rel (0) target = $region13
    $region12: #{tpu_custom_call.1} parent=1 // pred_region
      %s32 = ssub.s32 256, 256
      %33 = vsyncadd [#allocation4], %s32
      %s35 = sshll.u32 [#allocation5], 4
      %s36 = int_to_ptr.vmem [resolvable:$true] %s35
      %38 = dma.vmem_to_hbm [thread:$0]  %s36, 256, %s1, [#allocation4]
    $region13: #{tpu_custom_call.1} parent=1 // pred_fallthru
      _
    // Predicated region
    $region14: #{tpu_custom_call.1} parent=1 // pred_check
      _
    $region15: #{tpu_custom_call.1} parent=1 // pred_check_branch
      %40 = sbr.rel (0) target = $region17
    $region16: #{tpu_custom_call.1} parent=1 // pred_region
      %41 = dma.done [#allocation4], 256
    $region17: #{tpu_custom_call.1} parent=1 // pred_fallthru
      _
    %42 = vsyncpa [#allocation3], 1
    %43 = vsyncpa [#allocation4], 1

</llo_original>
